<compile_context>
chip_gen: v6e
topology: v6e:2x2x1
jax: 0.10.0
libtpu: 0.0.40
codegen_flags: <defaults>
</compile_context>

<pallas_src>
import jax
import jax.numpy as jnp
from jax import lax
from jax.experimental import pallas as pl
from jax.experimental.pallas import tpu as pltpu


def _round_up(x: int, m: int) -> int:
    return (x + m - 1) // m * m


def _tpu_budget():
    """Return (usable VMEM bytes per TensorCore, # TensorCores for the parallel axis)."""
    vmem_cap = 128 * 1024 * 1024
    n_cores = 1
    try:
        kind = jax.devices()[0].device_kind.lower()
        if "v7" in kind:
            vmem_cap = 64 * 1024 * 1024
            n_cores = 2
    except Exception:  # non-TPU / query failure: keep conservative defaults
        pass
    try:
        vmem_cap = pltpu.get_tpu_info().vmem_capacity_bytes
    except Exception:
        pass
    return int(vmem_cap * 0.85), n_cores


def _vmem_bytes(t_chunk, b_tile, h_pad, whh_elem_bytes):
    xw = 2 * t_chunk * b_tile * h_pad * 4          # double-buffered streamed input chunk
    whh = h_pad * h_pad * whh_elem_bytes           # single resident buffer (no pipelining)
    h_scr = b_tile * h_pad * 4                     # carried hidden-state scratch
    out = 2 * b_tile * h_pad * 4                   # double-buffered output block
    return xw + whh + h_scr + out


def _divisor_tiles(total, unit):
    return [d for d in range(total, unit - 1, -unit) if total % d == 0]


def _pick_tiles(T, b_pad, h_pad, whh_elem_bytes, usable_vmem, n_cores):
    # --- batch tile: one big tile on single-TC chips; even split on multi-TC chips ---
    cands = _divisor_tiles(b_pad, 8)
    if n_cores >= 2:
        even = [d for d in cands
                if (b_pad // d) >= n_cores and (b_pad // d) % n_cores == 0]
        if even:
            cands = even + [d for d in cands if d not in even]
    b_tile = cands[-1]
    for d in cands:
        if _vmem_bytes(1, d, h_pad, whh_elem_bytes) <= usable_vmem:
            b_tile = d
            break
    # --- time chunk: largest VMEM-fitting chunk; prefer exact divisors of T ----------
    t_cands = [c for c in (64, 32, 16, 8, 4, 2, 1) if c <= T] or [1]
    fitting = [c for c in t_cands
               if _vmem_bytes(c, b_tile, h_pad, whh_elem_bytes) <= usable_vmem] or [1]
    divisors = [c for c in fitting if T % c == 0]
    if divisors and divisors[0] * 4 >= fitting[0]:
        t_chunk = divisors[0]          # exact divisor: no padded (masked) steps
    else:
        t_chunk = fitting[0]           # pad T, mask the tail steps in-kernel
    return t_chunk, b_tile


def _make_recurrence_kernel(T_real, needs_mask, col_blk, mxu_dtype):
    def kernel(xw_ref, whh_ref, h_out_ref, h_ref):
        t_idx = pl.program_id(1)
        tc, _, hp = xw_ref.shape

        @pl.when(t_idx == 0)
        def _init():
            h_ref[...] = jnp.zeros_like(h_ref)

        whh = whh_ref[...]                       # VMEM-resident, loaded once per chunk
        n_blk = hp // col_blk

        def step(t, h):
            pre = xw_ref[t]                      # (b_tile, h_pad) f32, read just-in-time
            h_in = h.astype(mxu_dtype)
            if n_blk == 1:
                h_new = jnp.tanh(
                    pre + jnp.dot(h_in, whh, preferred_element_type=jnp.float32))
            else:
                # Lane-column blocking: tanh of block j (EUP) overlaps the MXU matmul
                # producing block j+1 on the serial critical path.
                blocks = []
                for j in range(n_blk):
                    sl = slice(j * col_blk, (j + 1) * col_blk)
                    blocks.append(jnp.tanh(
                        pre[:, sl]
                        + jnp.dot(h_in, whh[:, sl],
                                  preferred_element_type=jnp.float32)))
                h_new = jnp.concatenate(blocks, axis=-1)
            if needs_mask:
                # Zero-padded time steps are NOT a no-op (tanh(h @ W_hh) would still
                # update h), so carry h unchanged past the real sequence end.
                h_new = jnp.where(t_idx * tc + t < T_real, h_new, h)
            return h_new

        h = lax.fori_loop(0, tc, step, h_ref[...], unroll=True)
        h_ref[...] = h

        # Output block revisit note: time must stay the innermost grid axis so the
        # (b_tile, h_pad) out block is only committed after its last time chunk.
        @pl.when(t_idx == pl.num_programs(1) - 1)
        def _finalize():
            h_out_ref[...] = h.astype(h_out_ref.dtype)

    return kernel


def rnn_forward(tokens, embedding, W_xh, W_hh, b_h, W_hy, b_y,
                mxu_dtype=jnp.float32):
    """tokens: (B, T) int32. Returns logits (B, vocab_size) float32.

    mxu_dtype=jnp.bfloat16 halves W_hh VMEM/DMA and guarantees single-pass MXU
    throughput on v6e/v7x (lossy vs the f32 reference); default stays f32.
    """
    B, T = tokens.shape
    H = W_hh.shape[0]
    f32 = jnp.float32

    # --- XLA-side prologue: embedding gather + hoisted input projection ------------
    # TODO(synk): fuse the embedding gather + input projection into the kernel
    # (scalar-prefetched token ids + VMEM-resident tables) to avoid the xw HBM round
    # trip when E*H is small.
    x_emb = jnp.take(embedding.astype(f32), tokens, axis=0)             # (B, T, E)
    xw = jnp.einsum("bte,eh->bth", x_emb, W_xh.astype(f32)) + b_h.astype(f32)

    # --- padding to vreg/MXU-friendly shapes (exact: padded lanes stay zero) -------
    b_pad = _round_up(max(B, 8), 8)          # sublanes
    h_pad = _round_up(H, 128)                # lanes

    usable_vmem, n_cores = _tpu_budget()
    whh_elem_bytes = jnp.dtype(mxu_dtype).itemsize
    t_chunk, b_tile = _pick_tiles(T, b_pad, h_pad, whh_elem_bytes,
                                  usable_vmem, n_cores)
    t_pad = _round_up(T, t_chunk)

    xw = jnp.transpose(xw, (1, 0, 2))                                    # (T, B, H)
    xw = jnp.pad(xw, ((0, t_pad - T), (0, b_pad - B), (0, h_pad - H)))
    whh = jnp.pad(W_hh.astype(f32), ((0, h_pad - H), (0, h_pad - H))).astype(mxu_dtype)

    # Column block for MXU/EUP overlap (single block when the hidden dim is small).
    col_blk = 256 if (h_pad % 256 == 0 and h_pad // 256 >= 2) else h_pad

    grid = (b_pad // b_tile, t_pad // t_chunk)
    vmem_limit = int(min(
        usable_vmem,
        max(_vmem_bytes(t_chunk, b_tile, h_pad, whh_elem_bytes) * 1.25,
            16 * 1024 * 1024)))

    kernel = _make_recurrence_kernel(T_real=T, needs_mask=(t_pad != T),
                                     col_blk=col_blk, mxu_dtype=mxu_dtype)

    h_final = pl.pallas_call(
        kernel,
        out_shape=jax.ShapeDtypeStruct((b_pad, h_pad), f32),
        grid_spec=pltpu.PrefetchScalarGridSpec(
            num_scalar_prefetch=0,
            grid=grid,
            in_specs=[
                # Streamed xw chunks: double-buffered DMA overlaps the recurrence.
                pl.BlockSpec((t_chunk, b_tile, h_pad), lambda b, t: (t, b, 0)),
                # W_hh: whole array, VMEM-resident, single buffer (no pipelining).
                pl.BlockSpec(memory_space=pltpu.MemorySpace.VMEM),
            ],
            out_specs=pl.BlockSpec((b_tile, h_pad), lambda b, t: (b, 0)),
            scratch_shapes=[pltpu.VMEM((b_tile, h_pad), f32)],           # carried h
        ),
        compiler_params=pltpu.CompilerParams(
            # Batch tiles are independent ("parallel" -> sharded across TensorCores on
            # v7x); the time axis carries h and must stay "arbitrary" and innermost.
            dimension_semantics=("parallel", "arbitrary"),
            vmem_limit_bytes=vmem_limit,
        ),
    )(xw, whh)

    # --- XLA-side epilogue: output projection, kept out of the hot grid ------------
    logits = h_final[:B, :H] @ W_hy.astype(f32) + b_y.astype(f32)
    return logits


def init_params(key, p, embedding_dim, hidden_size):
    vocab_size = p + 2
    k = hidden_size ** 0.5
    k_emb, k_xh, k_hh, k_hy = jax.random.split(key, 4)
    embedding = jax.random.normal(k_emb, (vocab_size, embedding_dim), jnp.float32)
    W_xh = jax.random.normal(k_xh, (embedding_dim, hidden_size), jnp.float32) / k
    W_hh = jax.random.normal(k_hh, (hidden_size, hidden_size), jnp.float32) / k
    b_h = jnp.zeros((hidden_size,), jnp.float32)
    W_hy = jax.random.normal(k_hy, (hidden_size, vocab_size), jnp.float32) / k
    b_y = jnp.zeros((vocab_size,), jnp.float32)
    return embedding, W_xh, W_hh, b_h, W_hy, b_y


def _reference(tokens, embedding, W_xh, W_hh, b_h, W_hy, b_y):
    B, T = tokens.shape
    H = W_hh.shape[0]
    x_emb = jnp.take(embedding, tokens, axis=0)
    h = jnp.zeros((B, H), jnp.float32)
    for t in range(T):
        h = jnp.tanh(x_emb[:, t, :] @ W_xh + h @ W_hh + b_h)
    return h @ W_hy + b_y


if __name__ == "__main__":
    p = 16                    # vocab_size = p + 2 = 18
    embedding_dim = 32
    hidden_size = 32
    B = 2

    key = jax.random.PRNGKey(0)
    k_params, k_tok1, k_tok2 = jax.random.split(key, 3)
    params = init_params(k_params, p, embedding_dim, hidden_size)

    # Tolerance accounts for TPU MXU default-precision rounding possibly differing
    # between the Mosaic kernel and the XLA reference path; structural bugs are O(1).
    # (Use precision=HIGHEST everywhere if exact f32 matmul parity is required.)
    tol = dict(atol=1e-2, rtol=1e-2)

    # Case 1: T divisible by the chosen time chunk (no masking path).
    tokens = jax.random.randint(k_tok1, (B, 8), 0, p + 2, dtype=jnp.int32)
    logits = rnn_forward(tokens, *params)
    jax.block_until_ready(logits)
    ref = _reference(tokens, *params)
    assert logits.shape == (B, p + 2)
    assert jnp.allclose(logits, ref, **tol), float(jnp.max(jnp.abs(logits - ref)))

    # Case 2: T not divisible by the time chunk (exercises padded-step masking).
    tokens2 = jax.random.randint(k_tok2, (B, 13), 0, p + 2, dtype=jnp.int32)
    logits2 = rnn_forward(tokens2, *params)
    jax.block_until_ready(logits2)
    ref2 = _reference(tokens2, *params)
    assert logits2.shape == (B, p + 2)
    assert jnp.allclose(logits2, ref2, **tol), float(jnp.max(jnp.abs(logits2 - ref2)))

    print("KERNEL_OK")
</pallas_src>

<mosaic_0001>
module attributes {stable_mosaic.version = 11 : i64} {
  func.func @kernel(%arg0: i32, %arg1: i32, %arg2: memref<8x8x128xf32, #tpu.memory_space<vmem>>, %arg3: memref<128x128xf32, #tpu.memory_space<vmem>>, %arg4: memref<8x128xf32, #tpu.memory_space<vmem>>, %arg5: memref<8x128xf32, #tpu.memory_space<vmem>>) attributes {dimension_semantics = [#tpu.dimension_semantics<parallel>, #tpu.dimension_semantics<arbitrary>], iteration_bounds = array<i64: 1, 1>, scalar_prefetch = 0 : i64, scratch_operands = 1 : i64, tpu.core_type = #tpu.core_type<tc>, window_params = [{transform_indices = @transform_0, window_bounds = array<i64: 8, 8, 128>}, {pipeline_mode = #tpu.pipeline_mode<synchronous>, transform_indices = @transform_1, window_bounds = array<i64: 128, 128>}, {transform_indices = @transform_2, window_bounds = array<i64: 8, 128>}]} {
    %c0_i32 = arith.constant 0 : i32
    %0 = arith.cmpi eq, %arg1, %c0_i32 : i32
    %1 = arith.extui %0 : i1 to i32
    %c0_i32_0 = arith.constant 0 : i32
    %2 = arith.cmpi ne, %1, %c0_i32_0 : i32
    scf.if %2 {
      %cst_32 = arith.constant 0.000000e+00 : f32
      %57 = vector.broadcast %cst_32 : f32 to vector<8x128xf32>
      %c0_33 = arith.constant 0 : index
      %c0_34 = arith.constant 0 : index
      %58 = vector.load %arg5[%c0_33, %c0_34] : memref<8x128xf32, #tpu.memory_space<vmem>>, vector<8x128xf32>
      tpu.vector_store %arg5[%c0_33, %c0_34], %57 {strides = array<i32>} : memref<8x128xf32, #tpu.memory_space<vmem>>, vector<8x128xf32>,
    } else {
    }
    %c0 = arith.constant 0 : index
    %c0_1 = arith.constant 0 : index
    %3 = vector.load %arg3[%c0, %c0_1] : memref<128x128xf32, #tpu.memory_space<vmem>>, vector<128x128xf32>
    %c0_2 = arith.constant 0 : index
    %c0_3 = arith.constant 0 : index
    %4 = vector.load %arg5[%c0_2, %c0_3] : memref<8x128xf32, #tpu.memory_space<vmem>>, vector<8x128xf32>
    %c0_i32_4 = arith.constant 0 : i32
    %5 = arith.index_cast %c0_i32_4 : i32 to index
    %c0_5 = arith.constant 0 : index
    %c0_6 = arith.constant 0 : index
    %6 = vector.load %arg2[%5, %c0_5, %c0_6] : memref<8x8x128xf32, #tpu.memory_space<vmem>>, vector<1x8x128xf32>
    %7 = vector.shape_cast %6 : vector<1x8x128xf32> to vector<8x128xf32>
    %cst = arith.constant dense<0.000000e+00> : vector<8x128xf32>
    %8 = tpu.matmul %4, %3, %cst {dimension_numbers = #tpu.dot_dimension_numbers<[1], [0], [0], [1], [0, 0, 1, 1], [], []>} : vector<8x128xf32>, vector<128x128xf32>, vector<8x128xf32> -> vector<8x128xf32>
    %9 = arith.addf %7, %8 : vector<8x128xf32>
    %10 = math.tanh %9 : vector<8x128xf32>
    %c1_i32 = arith.constant 1 : i32
    %11 = arith.index_cast %c1_i32 : i32 to index
    %c0_7 = arith.constant 0 : index
    %c0_8 = arith.constant 0 : index
    %12 = vector.load %arg2[%11, %c0_7, %c0_8] : memref<8x8x128xf32, #tpu.memory_space<vmem>>, vector<1x8x128xf32>
    %13 = vector.shape_cast %12 : vector<1x8x128xf32> to vector<8x128xf32>
    %cst_9 = arith.constant dense<0.000000e+00> : vector<8x128xf32>
    %14 = tpu.matmul %10, %3, %cst_9 {dimension_numbers = #tpu.dot_dimension_numbers<[1], [0], [0], [1], [0, 0, 1, 1], [], []>} : vector<8x128xf32>, vector<128x128xf32>, vector<8x128xf32> -> vector<8x128xf32>
    %15 = arith.addf %13, %14 : vector<8x128xf32>
    %16 = math.tanh %15 : vector<8x128xf32>
    %c2_i32 = arith.constant 2 : i32
    %17 = arith.index_cast %c2_i32 : i32 to index
    %c0_10 = arith.constant 0 : index
    %c0_11 = arith.constant 0 : index
    %18 = vector.load %arg2[%17, %c0_10, %c0_11] : memref<8x8x128xf32, #tpu.memory_space<vmem>>, vector<1x8x128xf32>
    %19 = vector.shape_cast %18 : vector<1x8x128xf32> to vector<8x128xf32>
    %cst_12 = arith.constant dense<0.000000e+00> : vector<8x128xf32>
    %20 = tpu.matmul %16, %3, %cst_12 {dimension_numbers = #tpu.dot_dimension_numbers<[1], [0], [0], [1], [0, 0, 1, 1], [], []>} : vector<8x128xf32>, vector<128x128xf32>, vector<8x128xf32> -> vector<8x128xf32>
    %21 = arith.addf %19, %20 : vector<8x128xf32>
    %22 = math.tanh %21 : vector<8x128xf32>
    %c3_i32 = arith.constant 3 : i32
    %23 = arith.index_cast %c3_i32 : i32 to index
    %c0_13 = arith.constant 0 : index
    %c0_14 = arith.constant 0 : index
    %24 = vector.load %arg2[%23, %c0_13, %c0_14] : memref<8x8x128xf32, #tpu.memory_space<vmem>>, vector<1x8x128xf32>
    %25 = vector.shape_cast %24 : vector<1x8x128xf32> to vector<8x128xf32>
    %cst_15 = arith.constant dense<0.000000e+00> : vector<8x128xf32>
    %26 = tpu.matmul %22, %3, %cst_15 {dimension_numbers = #tpu.dot_dimension_numbers<[1], [0], [0], [1], [0, 0, 1, 1], [], []>} : vector<8x128xf32>, vector<128x128xf32>, vector<8x128xf32> -> vector<8x128xf32>
    %27 = arith.addf %25, %26 : vector<8x128xf32>
    %28 = math.tanh %27 : vector<8x128xf32>
    %c4_i32 = arith.constant 4 : i32
    %29 = arith.index_cast %c4_i32 : i32 to index
    %c0_16 = arith.constant 0 : index
    %c0_17 = arith.constant 0 : index
    %30 = vector.load %arg2[%29, %c0_16, %c0_17] : memref<8x8x128xf32, #tpu.memory_space<vmem>>, vector<1x8x128xf32>
    %31 = vector.shape_cast %30 : vector<1x8x128xf32> to vector<8x128xf32>
    %cst_18 = arith.constant dense<0.000000e+00> : vector<8x128xf32>
    %32 = tpu.matmul %28, %3, %cst_18 {dimension_numbers = #tpu.dot_dimension_numbers<[1], [0], [0], [1], [0, 0, 1, 1], [], []>} : vector<8x128xf32>, vector<128x128xf32>, vector<8x128xf32> -> vector<8x128xf32>
    %33 = arith.addf %31, %32 : vector<8x128xf32>
    %34 = math.tanh %33 : vector<8x128xf32>
    %c5_i32 = arith.constant 5 : i32
    %35 = arith.index_cast %c5_i32 : i32 to index
    %c0_19 = arith.constant 0 : index
    %c0_20 = arith.constant 0 : index
    %36 = vector.load %arg2[%35, %c0_19, %c0_20] : memref<8x8x128xf32, #tpu.memory_space<vmem>>, vector<1x8x128xf32>
    %37 = vector.shape_cast %36 : vector<1x8x128xf32> to vector<8x128xf32>
    %cst_21 = arith.constant dense<0.000000e+00> : vector<8x128xf32>
    %38 = tpu.matmul %34, %3, %cst_21 {dimension_numbers = #tpu.dot_dimension_numbers<[1], [0], [0], [1], [0, 0, 1, 1], [], []>} : vector<8x128xf32>, vector<128x128xf32>, vector<8x128xf32> -> vector<8x128xf32>
    %39 = arith.addf %37, %38 : vector<8x128xf32>
    %40 = math.tanh %39 : vector<8x128xf32>
    %c6_i32 = arith.constant 6 : i32
    %41 = arith.index_cast %c6_i32 : i32 to index
    %c0_22 = arith.constant 0 : index
    %c0_23 = arith.constant 0 : index
    %42 = vector.load %arg2[%41, %c0_22, %c0_23] : memref<8x8x128xf32, #tpu.memory_space<vmem>>, vector<1x8x128xf32>
    %43 = vector.shape_cast %42 : vector<1x8x128xf32> to vector<8x128xf32>
    %cst_24 = arith.constant dense<0.000000e+00> : vector<8x128xf32>
    %44 = tpu.matmul %40, %3, %cst_24 {dimension_numbers = #tpu.dot_dimension_numbers<[1], [0], [0], [1], [0, 0, 1, 1], [], []>} : vector<8x128xf32>, vector<128x128xf32>, vector<8x128xf32> -> vector<8x128xf32>
    %45 = arith.addf %43, %44 : vector<8x128xf32>
    %46 = math.tanh %45 : vector<8x128xf32>
    %c7_i32 = arith.constant 7 : i32
    %47 = arith.index_cast %c7_i32 : i32 to index
    %c0_25 = arith.constant 0 : index
    %c0_26 = arith.constant 0 : index
    %48 = vector.load %arg2[%47, %c0_25, %c0_26] : memref<8x8x128xf32, #tpu.memory_space<vmem>>, vector<1x8x128xf32>
    %49 = vector.shape_cast %48 : vector<1x8x128xf32> to vector<8x128xf32>
    %cst_27 = arith.constant dense<0.000000e+00> : vector<8x128xf32>
    %50 = tpu.matmul %46, %3, %cst_27 {dimension_numbers = #tpu.dot_dimension_numbers<[1], [0], [0], [1], [0, 0, 1, 1], [], []>} : vector<8x128xf32>, vector<128x128xf32>, vector<8x128xf32> -> vector<8x128xf32>
    %51 = arith.addf %49, %50 : vector<8x128xf32>
    %52 = math.tanh %51 : vector<8x128xf32>
    %c8_i32 = arith.constant 8 : i32
    %c0_28 = arith.constant 0 : index
    %c0_29 = arith.constant 0 : index
    %53 = vector.load %arg5[%c0_28, %c0_29] : memref<8x128xf32, #tpu.memory_space<vmem>>, vector<8x128xf32>
    tpu.vector_store %arg5[%c0_28, %c0_29], %52 {strides = array<i32>} : memref<8x128xf32, #tpu.memory_space<vmem>>, vector<8x128xf32>,
    %c0_i32_30 = arith.constant 0 : i32
    %54 = arith.cmpi eq, %arg1, %c0_i32_30 : i32
    %55 = arith.extui %54 : i1 to i32
    %c0_i32_31 = arith.constant 0 : i32
    %56 = arith.cmpi ne, %55, %c0_i32_31 : i32
    scf.if %56 {
      %c0_32 = arith.constant 0 : index
      %c0_33 = arith.constant 0 : index
      %57 = vector.load %arg4[%c0_32, %c0_33] : memref<8x128xf32, #tpu.memory_space<vmem>>, vector<8x128xf32>
      tpu.vector_store %arg4[%c0_32, %c0_33], %52 {strides = array<i32>} : memref<8x128xf32, #tpu.memory_space<vmem>>, vector<8x128xf32>,
    } else {
    }
    return
  }
  func.func @transform_0(%arg0: i32, %arg1: i32) -> (i32, i32, i32) {
    %c0_i32 = arith.constant 0 : i32
    %c0_i32_0 = arith.constant 0 : i32
    return %arg1, %arg0, %c0_i32 : i32, i32, i32
  }
  func.func @transform_1(%arg0: i32, %arg1: i32) -> (i32, i32) {
    %c0_i32 = arith.constant 0 : i32
    %c0_i32_0 = arith.constant 0 : i32
    %c0_i32_1 = arith.constant 0 : i32
    return %c0_i32, %c0_i32_0 : i32, i32
  }
  func.func @transform_2(%arg0: i32, %arg1: i32) -> (i32, i32) {
    %c0_i32 = arith.constant 0 : i32
    %c0_i32_0 = arith.constant 0 : i32
    return %arg0, %c0_i32 : i32, i32
  }
}

</mosaic_0001>

<llo_original>
// kernel: tpu_custom_call.1
$region0: #{tpu_custom_call.1}
  #allocation0 [shape = 'u32[]', space=smem, size = 0x4, offset = 0x4, fixed_abs, tag = 'smem constant byte address 0x4 - core index']
  #allocation1 [shape = 'u32[144,128]{1,0:T(1,128)}', space=vmem, size = 0x12000, scoped, tag = 'internal scratch']
  #allocation2 [shape = 'f32[8,128]{1,0:T(8,128)}', space=vmem, size = 0x1000, scoped, tag = 'scratch operand']
  %s0 = inlined_call_operand.hbm [shape: f32[8,8,128], index: 0, kind: input, shape index: {}]
  %s1 = inlined_call_operand.hbm [shape: f32[128,128], index: 1, kind: input, shape index: {}]
  %s2 = inlined_call_operand.hbm [shape: f32[8,128], index: 2, kind: output, shape index: {}]
  %s3 = sld [smem:[#allocation0]]
  $region34: #{tpu_custom_call.1} parent=0
    _
  %s5 = ssub.s32 1, %s3
  %s6 = scalar_select 0, %s5, %s3
  $region1: #{tpu_custom_call.1} parent=0
    #allocation3 [shape = 'u8[32768]{0}', space=vmem, size = 0x8000, scoped, tag = 'input window, operand 0, single buffered']
    #allocation4 [shape = 's32[1]{0}', space=sflag, size = 0x4, scoped, tag = 'scoped memory for tpu_custom_call.1']
    #allocation5 [shape = 's32[1]{0}', space=sflag, size = 0x4, scoped, tag = 'scoped memory for tpu_custom_call.1']
    #allocation6 [shape = 'u8[65536]{0}', space=vmem, size = 0x10000, scoped, tag = 'input window, operand 1, single buffered']
    #allocation7 [shape = 's32[1]{0}', space=sflag, size = 0x4, scoped, tag = 'scoped memory for tpu_custom_call.1']
    #allocation8 [shape = 'u8[4096]{0}', space=vmem, size = 0x1000, scoped, tag = 'output window, operand 0, single buffered']
    %7 = vsyncpa [#allocation4], 0
    %8 = vsyncpa [#allocation7], 0
    %9 = vsyncpa [#allocation5], 0
    // Predicated region
    $region2: #{tpu_custom_call.1} parent=1 // pred_check
      _
    $region3: #{tpu_custom_call.1} parent=1 // pred_check_branch
      %11 = sbr.rel (0) target = $region5
    $region4: #{tpu_custom_call.1} parent=1 // pred_region
      %s13 = ssub.s32 1024, 1024
      %14 = vsyncadd [#allocation4], %s13
      %s15 = sshll.u32 [#allocation3], 4
      %s16 = int_to_ptr.vmem [resolvable:$true] %s15
      %21 = dma.hbm_to_vmem [thread:$0]  %s0, 1024, %s16, [#allocation4], 128, 128, 8
    $region5: #{tpu_custom_call.1} parent=1 // pred_fallthru
      _
    // Predicated region
    $region6: #{tpu_custom_call.1} parent=1 // pred_check
      _
    $region7: #{tpu_custom_call.1} parent=1 // pred_check_branch
      %23 = sbr.rel (0) target = $region9
    $region8: #{tpu_custom_call.1} parent=1 // pred_region
      %s25 = ssub.s32 2048, 2048
      %26 = vsyncadd [#allocation7], %s25
      %s27 = sshll.u32 [#allocation6], 4
      %s28 = int_to_ptr.vmem [resolvable:$true] %s27
      %33 = dma.hbm_to_vmem [thread:$0]  %s1, 2048, %s28, [#allocation7], 128, 128, 8
    $region9: #{tpu_custom_call.1} parent=1 // pred_fallthru
      _
    // Predicated region
    $region10: #{tpu_custom_call.1} parent=1 // pred_check
      _
    $region11: #{tpu_custom_call.1} parent=1 // pred_check_branch
      %35 = sbr.rel (0) target = $region13
    $region12: #{tpu_custom_call.1} parent=1 // pred_region
      %36 = dma.done [#allocation4], 1024
    $region13: #{tpu_custom_call.1} parent=1 // pred_fallthru
      _
    // Predicated region
    $region14: #{tpu_custom_call.1} parent=1 // pred_check
      _
    $region15: #{tpu_custom_call.1} parent=1 // pred_check_branch
      %38 = sbr.rel (0) target = $region17
    $region16: #{tpu_custom_call.1} parent=1 // pred_region
      %39 = dma.done [#allocation7], 2048
    $region17: #{tpu_custom_call.1} parent=1 // pred_fallthru
      _
    %p40 = scmp.eq.s32.totalorder 0, 0
    // Predicated region
    $region18: #{tpu_custom_call.1} parent=1 // pred_check
      %p41 = pneg %p40
    $region19: #{tpu_custom_call.1} parent=1 // pred_check_branch
      %43 = sbr.rel (%p41) target = $region21
    $region20: #{tpu_custom_call.1} parent=1 // pred_region
      %44 = vst [vmem:[#allocation2] sm:$0xff] 0.0
    $region21: #{tpu_custom_call.1} parent=1 // pred_fallthru
      _
    %v45 = vld [vmem:[#allocation6] sm:$0xff]
    %v46 = vld [vmem:[#allocation6 + $0x8] sm:$0xff]
    %v47 = vld [vmem:[#allocation6 + $0x10] sm:$0xff]
    %v48 = vld [vmem:[#allocation6 + $0x18] sm:$0xff]
    %v49 = vld [vmem:[#allocation6 + $0x20] sm:$0xff]
    %v50 = vld [vmem:[#allocation6 + $0x28] sm:$0xff]
    %v51 = vld [vmem:[#allocation6 + $0x30] sm:$0xff]
    %v52 = vld [vmem:[#allocation6 + $0x38] sm:$0xff]
    %v53 = vld [vmem:[#allocation6 + $0x40] sm:$0xff]
    %v54 = vld [vmem:[#allocation6 + $0x48] sm:$0xff]
    %v55 = vld [vmem:[#allocation6 + $0x50] sm:$0xff]
    %v56 = vld [vmem:[#allocation6 + $0x58] sm:$0xff]
    %v57 = vld [vmem:[#allocation6 + $0x60] sm:$0xff]
    %v58 = vld [vmem:[#allocation6 + $0x68] sm:$0xff]
    %v59 = vld [vmem:[#allocation6 + $0x70] sm:$0xff]
    %v60 = vld [vmem:[#allocation6 + $0x78] sm:$0xff]
    %v61 = vld [vmem:[#allocation2] sm:$0xff]
    %v62 = vld [vmem:[#allocation3] sm:$0xff]
    %63 = vmatprep.subr.mxu0 0.0
    %64 = vmatpush1.msra.mxu0 %v60
    %65 = vmatprep.subr.mxu0 0.0
    %66 = vmatpush1.msra.mxu0 %v59
    %67 = vmatprep.subr.mxu0 0.0
    %68 = vmatpush1.msra.mxu0 %v58
    %69 = vmatprep.subr.mxu0 0.0
    %70 = vmatpush1.msra.mxu0 %v57
    %71 = vmatprep.subr.mxu0 0.0
    %72 = vmatpush1.msra.mxu0 %v56
    %73 = vmatprep.subr.mxu0 0.0
    %74 = vmatpush1.msra.mxu0 %v55
    %75 = vmatprep.subr.mxu0 0.0
    %76 = vmatpush1.msra.mxu0 %v54
    %77 = vmatprep.subr.mxu0 0.0
    %78 = vmatpush1.msra.mxu0 %v53
    %79 = vmatprep.subr.mxu0 0.0
    %80 = vmatpush1.msra.mxu0 %v52
    %81 = vmatprep.subr.mxu0 0.0
    %82 = vmatpush1.msra.mxu0 %v51
    %83 = vmatprep.subr.mxu0 0.0
    %84 = vmatpush1.msra.mxu0 %v50
    %85 = vmatprep.subr.mxu0 0.0
    %86 = vmatpush1.msra.mxu0 %v49
    %87 = vmatprep.subr.mxu0 0.0
    %88 = vmatpush1.msra.mxu0 %v48
    %89 = vmatprep.subr.mxu0 0.0
    %90 = vmatpush1.msra.mxu0 %v47
    %91 = vmatprep.subr.mxu0 0.0
    %92 = vmatpush1.msra.mxu0 %v46
    %93 = vmatprep.subr.mxu0 0.0
    %94 = vmatpush1.msra.mxu0 %v45
    %95 = vmatprep.subr.mxu0 0.0
    %96 = vmatpush2.msra.mxu0 0.0
    %97 = vmatprep.subr.mxu0 0.0
    %98 = vmatpush2.msra.mxu0 0.0
    %99 = vmatprep.subr.mxu0 0.0
    %100 = vmatpush2.msra.mxu0 0.0
    %101 = vmatprep.subr.mxu0 0.0
    %102 = vmatpush2.msra.mxu0 0.0
    %103 = vmatprep.subr.mxu0 0.0
    %104 = vmatpush2.msra.mxu0 0.0
    %105 = vmatprep.subr.mxu0 0.0
    %106 = vmatpush2.msra.mxu0 0.0
    %107 = vmatprep.subr.mxu0 0.0
    %108 = vmatpush2.msra.mxu0 0.0
    %109 = vmatprep.subr.mxu0 0.0
    %110 = vmatpush2.msra.mxu0 0.0
    %111 = vmatprep.subr.mxu0 0.0
    %112 = vmatpush2.msra.mxu0 0.0
    %113 = vmatprep.subr.mxu0 0.0
    %114 = vmatpush2.msra.mxu0 0.0
    %115 = vmatprep.subr.mxu0 0.0
    %116 = vmatpush2.msra.mxu0 0.0
    %117 = vmatprep.subr.mxu0 0.0
    %118 = vmatpush2.msra.mxu0 0.0
    %119 = vmatprep.subr.mxu0 0.0
    %120 = vmatpush2.msra.mxu0 0.0
    %121 = vmatprep.subr.mxu0 0.0
    %122 = vmatpush2.msra.mxu0 0.0
    %123 = vmatprep.subr.mxu0 0.0
    %124 = vmatpush2.msra.mxu0 0.0
    %125 = vmatprep.subr.mxu0 0.0
    %126 = vmatpush2.msra.mxu0 0.0
    %127 = vmatprep.mubr.f32.mxu0 0.0
    %128 = vmatmul.mubr.f32.gmra.mxu0 %v61
    %v129 = vpop.f32.mrf.mxu0
    %v130 = vadd.f32 0.0, %v129
    %v131 = vpop.f32.mrf.mxu0
    %132 = vdwg.mxu0
    %v133 = vadd.f32 %v62, %v130
    %v134 = vtanh.pop %v133
    %s135 = scalar_lea.vmem [#allocation3], 8
    %v136 = vld [vmem:[%s135] sm:$0xff]
    %137 = vmatprep.subr.mxu0 0.0
    %138 = vmatpush1.msra.mxu0 %v60
    %139 = vmatprep.subr.mxu0 0.0
    %140 = vmatpush1.msra.mxu0 %v59
    %141 = vmatprep.subr.mxu0 0.0
    %142 = vmatpush1.msra.mxu0 %v58
    %143 = vmatprep.subr.mxu0 0.0
    %144 = vmatpush1.msra.mxu0 %v57
    %145 = vmatprep.subr.mxu0 0.0
    %146 = vmatpush1.msra.mxu0 %v56
    %147 = vmatprep.subr.mxu0 0.0
    %148 = vmatpush1.msra.mxu0 %v55
    %149 = vmatprep.subr.mxu0 0.0
    %150 = vmatpush1.msra.mxu0 %v54
    %151 = vmatprep.subr.mxu0 0.0
    %152 = vmatpush1.msra.mxu0 %v53
    %153 = vmatprep.subr.mxu0 0.0
    %154 = vmatpush1.msra.mxu0 %v52
    %155 = vmatprep.subr.mxu0 0.0
    %156 = vmatpush1.msra.mxu0 %v51
    %157 = vmatprep.subr.mxu0 0.0
    %158 = vmatpush1.msra.mxu0 %v50
    %159 = vmatprep.subr.mxu0 0.0
    %160 = vmatpush1.msra.mxu0 %v49
    %161 = vmatprep.subr.mxu0 0.0
    %162 = vmatpush1.msra.mxu0 %v48
    %163 = vmatprep.subr.mxu0 0.0
    %164 = vmatpush1.msra.mxu0 %v47
    %165 = vmatprep.subr.mxu0 0.0
    %166 = vmatpush1.msra.mxu0 %v46
    %167 = vmatprep.subr.mxu0 0.0
    %168 = vmatpush1.msra.mxu0 %v45
    %169 = vmatprep.subr.mxu0 0.0
    %170 = vmatpush2.msra.mxu0 0.0
    %171 = vmatprep.subr.mxu0 0.0
    %172 = vmatpush2.msra.mxu0 0.0
    %173 = vmatprep.subr.mxu0 0.0
    %174 = vmatpush2.msra.mxu0 0.0
    %175 = vmatprep.subr.mxu0 0.0
    %176 = vmatpush2.msra.mxu0 0.0
    %177 = vmatprep.subr.mxu0 0.0
    %178 = vmatpush2.msra.mxu0 0.0
    %179 = vmatprep.subr.mxu0 0.0
    %180 = vmatpush2.msra.mxu0 0.0
    %181 = vmatprep.subr.mxu0 0.0
    %182 = vmatpush2.msra.mxu0 0.0
    %183 = vmatprep.subr.mxu0 0.0
    %184 = vmatpush2.msra.mxu0 0.0
    %185 = vmatprep.subr.mxu0 0.0
    %186 = vmatpush2.msra.mxu0 0.0
    %187 = vmatprep.subr.mxu0 0.0
    %188 = vmatpush2.msra.mxu0 0.0
    %189 = vmatprep.subr.mxu0 0.0
    %190 = vmatpush2.msra.mxu0 0.0
    %191 = vmatprep.subr.mxu0 0.0
    %192 = vmatpush2.msra.mxu0 0.0
    %193 = vmatprep.subr.mxu0 0.0
    %194 = vmatpush2.msra.mxu0 0.0
    %195 = vmatprep.subr.mxu0 0.0
    %196 = vmatpush2.msra.mxu0 0.0
    %197 = vmatprep.subr.mxu0 0.0
    %198 = vmatpush2.msra.mxu0 0.0
    %199 = vmatprep.subr.mxu0 0.0
    %200 = vmatpush2.msra.mxu0 0.0
    %201 = vmatprep.mubr.f32.mxu0 0.0
    %202 = vmatmul.mubr.f32.gmra.mxu0 %v134
    %v203 = vpop.f32.mrf.mxu0
    %v204 = vadd.f32 0.0, %v203
    %v205 = vpop.f32.mrf.mxu0
    %206 = vdwg.mxu0
    %v207 = vadd.f32 %v136, %v204
    %v208 = vtanh.pop %v207
    %s209 = scalar_lea.vmem [#allocation3], 16
    %v210 = vld [vmem:[%s209] sm:$0xff]
    %211 = vmatprep.subr.mxu0 0.0
    %212 = vmatpush1.msra.mxu0 %v60
    %213 = vmatprep.subr.mxu0 0.0
    %214 = vmatpush1.msra.mxu0 %v59
    %215 = vmatprep.subr.mxu0 0.0
    %216 = vmatpush1.msra.mxu0 %v58
    %217 = vmatprep.subr.mxu0 0.0
    %218 = vmatpush1.msra.mxu0 %v57
    %219 = vmatprep.subr.mxu0 0.0
    %220 = vmatpush1.msra.mxu0 %v56
    %221 = vmatprep.subr.mxu0 0.0
    %222 = vmatpush1.msra.mxu0 %v55
    %223 = vmatprep.subr.mxu0 0.0
    %224 = vmatpush1.msra.mxu0 %v54
    %225 = vmatprep.subr.mxu0 0.0
    %226 = vmatpush1.msra.mxu0 %v53
    %227 = vmatprep.subr.mxu0 0.0
    %228 = vmatpush1.msra.mxu0 %v52
    %229 = vmatprep.subr.mxu0 0.0
    %230 = vmatpush1.msra.mxu0 %v51
    %231 = vmatprep.subr.mxu0 0.0
    %232 = vmatpush1.msra.mxu0 %v50
    %233 = vmatprep.subr.mxu0 0.0
    %234 = vmatpush1.msra.mxu0 %v49
    %235 = vmatprep.subr.mxu0 0.0
    %236 = vmatpush1.msra.mxu0 %v48
    %237 = vmatprep.subr.mxu0 0.0
    %238 = vmatpush1.msra.mxu0 %v47
    %239 = vmatprep.subr.mxu0 0.0
    %240 = vmatpush1.msra.mxu0 %v46
    %241 = vmatprep.subr.mxu0 0.0
    %242 = vmatpush1.msra.mxu0 %v45
    %243 = vmatprep.subr.mxu0 0.0
    %244 = vmatpush2.msra.mxu0 0.0
    %245 = vmatprep.subr.mxu0 0.0
    %246 = vmatpush2.msra.mxu0 0.0
    %247 = vmatprep.subr.mxu0 0.0
    %248 = vmatpush2.msra.mxu0 0.0
    %249 = vmatprep.subr.mxu0 0.0
    %250 = vmatpush2.msra.mxu0 0.0
    %251 = vmatprep.subr.mxu0 0.0
    %252 = vmatpush2.msra.mxu0 0.0
    %253 = vmatprep.subr.mxu0 0.0
    %254 = vmatpush2.msra.mxu0 0.0
    %255 = vmatprep.subr.mxu0 0.0
    %256 = vmatpush2.msra.mxu0 0.0
    %257 = vmatprep.subr.mxu0 0.0
    %258 = vmatpush2.msra.mxu0 0.0
    %259 = vmatprep.subr.mxu0 0.0
    %260 = vmatpush2.msra.mxu0 0.0
    %261 = vmatprep.subr.mxu0 0.0
    %262 = vmatpush2.msra.mxu0 0.0
    %263 = vmatprep.subr.mxu0 0.0
    %264 = vmatpush2.msra.mxu0 0.0
    %265 = vmatprep.subr.mxu0 0.0
    %266 = vmatpush2.msra.mxu0 0.0
    %267 = vmatprep.subr.mxu0 0.0
    %268 = vmatpush2.msra.mxu0 0.0
    %269 = vmatprep.subr.mxu0 0.0
    %270 = vmatpush2.msra.mxu0 0.0
    %271 = vmatprep.subr.mxu0 0.0
    %272 = vmatpush2.msra.mxu0 0.0
    %273 = vmatprep.subr.mxu0 0.0
    %274 = vmatpush2.msra.mxu0 0.0
    %275 = vmatprep.mubr.f32.mxu0 0.0
    %276 = vmatmul.mubr.f32.gmra.mxu0 %v208
    %v277 = vpop.f32.mrf.mxu0
    %v278 = vadd.f32 0.0, %v277
    %v279 = vpop.f32.mrf.mxu0
    %280 = vdwg.mxu0
    %v281 = vadd.f32 %v210, %v278
    %v282 = vtanh.pop %v281
    %s283 = scalar_lea.vmem [#allocation3], 24
    %v284 = vld [vmem:[%s283] sm:$0xff]
    %285 = vmatprep.subr.mxu0 0.0
    %286 = vmatpush1.msra.mxu0 %v60
    %287 = vmatprep.subr.mxu0 0.0
    %288 = vmatpush1.msra.mxu0 %v59
    %289 = vmatprep.subr.mxu0 0.0
    %290 = vmatpush1.msra.mxu0 %v58
    %291 = vmatprep.subr.mxu0 0.0
    %292 = vmatpush1.msra.mxu0 %v57
    %293 = vmatprep.subr.mxu0 0.0
    %294 = vmatpush1.msra.mxu0 %v56
    %295 = vmatprep.subr.mxu0 0.0
    %296 = vmatpush1.msra.mxu0 %v55
    %297 = vmatprep.subr.mxu0 0.0
    %298 = vmatpush1.msra.mxu0 %v54
    %299 = vmatprep.subr.mxu0 0.0
    %300 = vmatpush1.msra.mxu0 %v53
    %301 = vmatprep.subr.mxu0 0.0
    %302 = vmatpush1.msra.mxu0 %v52
    %303 = vmatprep.subr.mxu0 0.0
    %304 = vmatpush1.msra.mxu0 %v51
    %305 = vmatprep.subr.mxu0 0.0
    %306 = vmatpush1.msra.mxu0 %v50
    %307 = vmatprep.subr.mxu0 0.0
    %308 = vmatpush1.msra.mxu0 %v49
    %309 = vmatprep.subr.mxu0 0.0
    %310 = vmatpush1.msra.mxu0 %v48
    %311 = vmatprep.subr.mxu0 0.0
    %312 = vmatpush1.msra.mxu0 %v47
    %313 = vmatprep.subr.mxu0 0.0
    %314 = vmatpush1.msra.mxu0 %v46
    %315 = vmatprep.subr.mxu0 0.0
    %316 = vmatpush1.msra.mxu0 %v45
    %317 = vmatprep.subr.mxu0 0.0
    %318 = vmatpush2.msra.mxu0 0.0
    %319 = vmatprep.subr.mxu0 0.0
    %320 = vmatpush2.msra.mxu0 0.0
    %321 = vmatprep.subr.mxu0 0.0
    %322 = vmatpush2.msra.mxu0 0.0
    %323 = vmatprep.subr.mxu0 0.0
    %324 = vmatpush2.msra.mxu0 0.0
    %325 = vmatprep.subr.mxu0 0.0
    %326 = vmatpush2.msra.mxu0 0.0
    %327 = vmatprep.subr.mxu0 0.0
    %328 = vmatpush2.msra.mxu0 0.0
    %329 = vmatprep.subr.mxu0 0.0
    %330 = vmatpush2.msra.mxu0 0.0
    %331 = vmatprep.subr.mxu0 0.0
    %332 = vmatpush2.msra.mxu0 0.0
    %333 = vmatprep.subr.mxu0 0.0
    %334 = vmatpush2.msra.mxu0 0.0
    %335 = vmatprep.subr.mxu0 0.0
    %336 = vmatpush2.msra.mxu0 0.0
    %337 = vmatprep.subr.mxu0 0.0
    %338 = vmatpush2.msra.mxu0 0.0
    %339 = vmatprep.subr.mxu0 0.0
    %340 = vmatpush2.msra.mxu0 0.0
    %341 = vmatprep.subr.mxu0 0.0
    %342 = vmatpush2.msra.mxu0 0.0
    %343 = vmatprep.subr.mxu0 0.0
    %344 = vmatpush2.msra.mxu0 0.0
    %345 = vmatprep.subr.mxu0 0.0
    %346 = vmatpush2.msra.mxu0 0.0
    %347 = vmatprep.subr.mxu0 0.0
    %348 = vmatpush2.msra.mxu0 0.0
    %349 = vmatprep.mubr.f32.mxu0 0.0
    %350 = vmatmul.mubr.f32.gmra.mxu0 %v282
    %v351 = vpop.f32.mrf.mxu0
    %v352 = vadd.f32 0.0, %v351
    %v353 = vpop.f32.mrf.mxu0
    %354 = vdwg.mxu0
    %v355 = vadd.f32 %v284, %v352
    %v356 = vtanh.pop %v355
    %s357 = scalar_lea.vmem [#allocation3], 32
    %v358 = vld [vmem:[%s357] sm:$0xff]
    %359 = vmatprep.subr.mxu0 0.0
    %360 = vmatpush1.msra.mxu0 %v60
    %361 = vmatprep.subr.mxu0 0.0
    %362 = vmatpush1.msra.mxu0 %v59
    %363 = vmatprep.subr.mxu0 0.0
    %364 = vmatpush1.msra.mxu0 %v58
    %365 = vmatprep.subr.mxu0 0.0
    %366 = vmatpush1.msra.mxu0 %v57
    %367 = vmatprep.subr.mxu0 0.0
    %368 = vmatpush1.msra.mxu0 %v56
    %369 = vmatprep.subr.mxu0 0.0
    %370 = vmatpush1.msra.mxu0 %v55
    %371 = vmatprep.subr.mxu0 0.0
    %372 = vmatpush1.msra.mxu0 %v54
    %373 = vmatprep.subr.mxu0 0.0
    %374 = vmatpush1.msra.mxu0 %v53
    %375 = vmatprep.subr.mxu0 0.0
    %376 = vmatpush1.msra.mxu0 %v52
    %377 = vmatprep.subr.mxu0 0.0
    %378 = vmatpush1.msra.mxu0 %v51
    %379 = vmatprep.subr.mxu0 0.0
    %380 = vmatpush1.msra.mxu0 %v50
    %381 = vmatprep.subr.mxu0 0.0
    %382 = vmatpush1.msra.mxu0 %v49
    %383 = vmatprep.subr.mxu0 0.0
    %384 = vmatpush1.msra.mxu0 %v48
    %385 = vmatprep.subr.mxu0 0.0
    %386 = vmatpush1.msra.mxu0 %v47
    %387 = vmatprep.subr.mxu0 0.0
    %388 = vmatpush1.msra.mxu0 %v46
    %389 = vmatprep.subr.mxu0 0.0
    %390 = vmatpush1.msra.mxu0 %v45
    %391 = vmatprep.subr.mxu0 0.0
    %392 = vmatpush2.msra.mxu0 0.0
    %393 = vmatprep.subr.mxu0 0.0
    %394 = vmatpush2.msra.mxu0 0.0
    %395 = vmatprep.subr.mxu0 0.0
    %396 = vmatpush2.msra.mxu0 0.0
    %397 = vmatprep.subr.mxu0 0.0
    %398 = vmatpush2.msra.mxu0 0.0
    %399 = vmatprep.subr.mxu0 0.0
    %400 = vmatpush2.msra.mxu0 0.0
    %401 = vmatprep.subr.mxu0 0.0
    %402 = vmatpush2.msra.mxu0 0.0
    %403 = vmatprep.subr.mxu0 0.0
    %404 = vmatpush2.msra.mxu0 0.0
    %405 = vmatprep.subr.mxu0 0.0
    %406 = vmatpush2.msra.mxu0 0.0
    %407 = vmatprep.subr.mxu0 0.0
    %408 = vmatpush2.msra.mxu0 0.0
    %409 = vmatprep.subr.mxu0 0.0
    %410 = vmatpush2.msra.mxu0 0.0
    %411 = vmatprep.subr.mxu0 0.0
    %412 = vmatpush2.msra.mxu0 0.0
    %413 = vmatprep.subr.mxu0 0.0
    %414 = vmatpush2.msra.mxu0 0.0
    %415 = vmatprep.subr.mxu0 0.0
    %416 = vmatpush2.msra.mxu0 0.0
    %417 = vmatprep.subr.mxu0 0.0
    %418 = vmatpush2.msra.mxu0 0.0
    %419 = vmatprep.subr.mxu0 0.0
    %420 = vmatpush2.msra.mxu0 0.0
    %421 = vmatprep.subr.mxu0 0.0
    %422 = vmatpush2.msra.mxu0 0.0
    %423 = vmatprep.mubr.f32.mxu0 0.0
    %424 = vmatmul.mubr.f32.gmra.mxu0 %v356
    %v425 = vpop.f32.mrf.mxu0
    %v426 = vadd.f32 0.0, %v425
    %v427 = vpop.f32.mrf.mxu0
    %428 = vdwg.mxu0
    %v429 = vadd.f32 %v358, %v426
    %v430 = vtanh.pop %v429
    %s431 = scalar_lea.vmem [#allocation3], 40
    %v432 = vld [vmem:[%s431] sm:$0xff]
    %433 = vmatprep.subr.mxu0 0.0
    %434 = vmatpush1.msra.mxu0 %v60
    %435 = vmatprep.subr.mxu0 0.0
    %436 = vmatpush1.msra.mxu0 %v59
    %437 = vmatprep.subr.mxu0 0.0
    %438 = vmatpush1.msra.mxu0 %v58
    %439 = vmatprep.subr.mxu0 0.0
    %440 = vmatpush1.msra.mxu0 %v57
    %441 = vmatprep.subr.mxu0 0.0
    %442 = vmatpush1.msra.mxu0 %v56
    %443 = vmatprep.subr.mxu0 0.0
    %444 = vmatpush1.msra.mxu0 %v55
    %445 = vmatprep.subr.mxu0 0.0
    %446 = vmatpush1.msra.mxu0 %v54
    %447 = vmatprep.subr.mxu0 0.0
    %448 = vmatpush1.msra.mxu0 %v53
    %449 = vmatprep.subr.mxu0 0.0
    %450 = vmatpush1.msra.mxu0 %v52
    %451 = vmatprep.subr.mxu0 0.0
    %452 = vmatpush1.msra.mxu0 %v51
    %453 = vmatprep.subr.mxu0 0.0
    %454 = vmatpush1.msra.mxu0 %v50
    %455 = vmatprep.subr.mxu0 0.0
    %456 = vmatpush1.msra.mxu0 %v49
    %457 = vmatprep.subr.mxu0 0.0
    %458 = vmatpush1.msra.mxu0 %v48
    %459 = vmatprep.subr.mxu0 0.0
    %460 = vmatpush1.msra.mxu0 %v47
    %461 = vmatprep.subr.mxu0 0.0
    %462 = vmatpush1.msra.mxu0 %v46
    %463 = vmatprep.subr.mxu0 0.0
    %464 = vmatpush1.msra.mxu0 %v45
    %465 = vmatprep.subr.mxu0 0.0
    %466 = vmatpush2.msra.mxu0 0.0
    %467 = vmatprep.subr.mxu0 0.0
    %468 = vmatpush2.msra.mxu0 0.0
    %469 = vmatprep.subr.mxu0 0.0
    %470 = vmatpush2.msra.mxu0 0.0
    %471 = vmatprep.subr.mxu0 0.0
    %472 = vmatpush2.msra.mxu0 0.0
    %473 = vmatprep.subr.mxu0 0.0
    %474 = vmatpush2.msra.mxu0 0.0
    %475 = vmatprep.subr.mxu0 0.0
    %476 = vmatpush2.msra.mxu0 0.0
    %477 = vmatprep.subr.mxu0 0.0
    %478 = vmatpush2.msra.mxu0 0.0
    %479 = vmatprep.subr.mxu0 0.0
    %480 = vmatpush2.msra.mxu0 0.0
    %481 = vmatprep.subr.mxu0 0.0
    %482 = vmatpush2.msra.mxu0 0.0
    %483 = vmatprep.subr.mxu0 0.0
    %484 = vmatpush2.msra.mxu0 0.0
    %485 = vmatprep.subr.mxu0 0.0
    %486 = vmatpush2.msra.mxu0 0.0
    %487 = vmatprep.subr.mxu0 0.0
    %488 = vmatpush2.msra.mxu0 0.0
    %489 = vmatprep.subr.mxu0 0.0
    %490 = vmatpush2.msra.mxu0 0.0
    %491 = vmatprep.subr.mxu0 0.0
    %492 = vmatpush2.msra.mxu0 0.0
    %493 = vmatprep.subr.mxu0 0.0
    %494 = vmatpush2.msra.mxu0 0.0
    %495 = vmatprep.subr.mxu0 0.0
    %496 = vmatpush2.msra.mxu0 0.0
    %497 = vmatprep.mubr.f32.mxu0 0.0
    %498 = vmatmul.mubr.f32.gmra.mxu0 %v430
    %v499 = vpop.f32.mrf.mxu0
    %v500 = vadd.f32 0.0, %v499
    %v501 = vpop.f32.mrf.mxu0
    %502 = vdwg.mxu0
    %v503 = vadd.f32 %v432, %v500
    %v504 = vtanh.pop %v503
    %s505 = scalar_lea.vmem [#allocation3], 48
    %v506 = vld [vmem:[%s505] sm:$0xff]
    %507 = vmatprep.subr.mxu0 0.0
    %508 = vmatpush1.msra.mxu0 %v60
    %509 = vmatprep.subr.mxu0 0.0
    %510 = vmatpush1.msra.mxu0 %v59
    %511 = vmatprep.subr.mxu0 0.0
    %512 = vmatpush1.msra.mxu0 %v58
    %513 = vmatprep.subr.mxu0 0.0
    %514 = vmatpush1.msra.mxu0 %v57
    %515 = vmatprep.subr.mxu0 0.0
    %516 = vmatpush1.msra.mxu0 %v56
    %517 = vmatprep.subr.mxu0 0.0
    %518 = vmatpush1.msra.mxu0 %v55
    %519 = vmatprep.subr.mxu0 0.0
    %520 = vmatpush1.msra.mxu0 %v54
    %521 = vmatprep.subr.mxu0 0.0
    %522 = vmatpush1.msra.mxu0 %v53
    %523 = vmatprep.subr.mxu0 0.0
    %524 = vmatpush1.msra.mxu0 %v52
    %525 = vmatprep.subr.mxu0 0.0
    %526 = vmatpush1.msra.mxu0 %v51
    %527 = vmatprep.subr.mxu0 0.0
    %528 = vmatpush1.msra.mxu0 %v50
    %529 = vmatprep.subr.mxu0 0.0
    %530 = vmatpush1.msra.mxu0 %v49
    %531 = vmatprep.subr.mxu0 0.0
    %532 = vmatpush1.msra.mxu0 %v48
    %533 = vmatprep.subr.mxu0 0.0
    %534 = vmatpush1.msra.mxu0 %v47
    %535 = vmatprep.subr.mxu0 0.0
    %536 = vmatpush1.msra.mxu0 %v46
    %537 = vmatprep.subr.mxu0 0.0
    %538 = vmatpush1.msra.mxu0 %v45
    %539 = vmatprep.subr.mxu0 0.0
    %540 = vmatpush2.msra.mxu0 0.0
    %541 = vmatprep.subr.mxu0 0.0
    %542 = vmatpush2.msra.mxu0 0.0
    %543 = vmatprep.subr.mxu0 0.0
    %544 = vmatpush2.msra.mxu0 0.0
    %545 = vmatprep.subr.mxu0 0.0
    %546 = vmatpush2.msra.mxu0 0.0
    %547 = vmatprep.subr.mxu0 0.0
    %548 = vmatpush2.msra.mxu0 0.0
    %549 = vmatprep.subr.mxu0 0.0
    %550 = vmatpush2.msra.mxu0 0.0
    %551 = vmatprep.subr.mxu0 0.0
    %552 = vmatpush2.msra.mxu0 0.0
    %553 = vmatprep.subr.mxu0 0.0
    %554 = vmatpush2.msra.mxu0 0.0
    %555 = vmatprep.subr.mxu0 0.0
    %556 = vmatpush2.msra.mxu0 0.0
    %557 = vmatprep.subr.mxu0 0.0
    %558 = vmatpush2.msra.mxu0 0.0
    %559 = vmatprep.subr.mxu0 0.0
    %560 = vmatpush2.msra.mxu0 0.0
    %561 = vmatprep.subr.mxu0 0.0
    %562 = vmatpush2.msra.mxu0 0.0
    %563 = vmatprep.subr.mxu0 0.0
    %564 = vmatpush2.msra.mxu0 0.0
    %565 = vmatprep.subr.mxu0 0.0
    %566 = vmatpush2.msra.mxu0 0.0
    %567 = vmatprep.subr.mxu0 0.0
    %568 = vmatpush2.msra.mxu0 0.0
    %569 = vmatprep.subr.mxu0 0.0
    %570 = vmatpush2.msra.mxu0 0.0
    %571 = vmatprep.mubr.f32.mxu0 0.0
    %572 = vmatmul.mubr.f32.gmra.mxu0 %v504
    %v573 = vpop.f32.mrf.mxu0
    %v574 = vadd.f32 0.0, %v573
    %v575 = vpop.f32.mrf.mxu0
    %576 = vdwg.mxu0
    %v577 = vadd.f32 %v506, %v574
    %v578 = vtanh.pop %v577
    %s579 = scalar_lea.vmem [#allocation3], 56
    %v580 = vld [vmem:[%s579] sm:$0xff]
    %581 = vmatprep.subr.mxu0 0.0
    %582 = vmatpush1.msra.mxu0 %v60
    %583 = vmatprep.subr.mxu0 0.0
    %584 = vmatpush1.msra.mxu0 %v59
    %585 = vmatprep.subr.mxu0 0.0
    %586 = vmatpush1.msra.mxu0 %v58
    %587 = vmatprep.subr.mxu0 0.0
    %588 = vmatpush1.msra.mxu0 %v57
    %589 = vmatprep.subr.mxu0 0.0
    %590 = vmatpush1.msra.mxu0 %v56
    %591 = vmatprep.subr.mxu0 0.0
    %592 = vmatpush1.msra.mxu0 %v55
    %593 = vmatprep.subr.mxu0 0.0
    %594 = vmatpush1.msra.mxu0 %v54
    %595 = vmatprep.subr.mxu0 0.0
    %596 = vmatpush1.msra.mxu0 %v53
    %597 = vmatprep.subr.mxu0 0.0
    %598 = vmatpush1.msra.mxu0 %v52
    %599 = vmatprep.subr.mxu0 0.0
    %600 = vmatpush1.msra.mxu0 %v51
    %601 = vmatprep.subr.mxu0 0.0
    %602 = vmatpush1.msra.mxu0 %v50
    %603 = vmatprep.subr.mxu0 0.0
    %604 = vmatpush1.msra.mxu0 %v49
    %605 = vmatprep.subr.mxu0 0.0
    %606 = vmatpush1.msra.mxu0 %v48
    %607 = vmatprep.subr.mxu0 0.0
    %608 = vmatpush1.msra.mxu0 %v47
    %609 = vmatprep.subr.mxu0 0.0
    %610 = vmatpush1.msra.mxu0 %v46
    %611 = vmatprep.subr.mxu0 0.0
    %612 = vmatpush1.msra.mxu0 %v45
    %613 = vmatprep.subr.mxu0 0.0
    %614 = vmatpush2.msra.mxu0 0.0
    %615 = vmatprep.subr.mxu0 0.0
    %616 = vmatpush2.msra.mxu0 0.0
    %617 = vmatprep.subr.mxu0 0.0
    %618 = vmatpush2.msra.mxu0 0.0
    %619 = vmatprep.subr.mxu0 0.0
    %620 = vmatpush2.msra.mxu0 0.0
    %621 = vmatprep.subr.mxu0 0.0
    %622 = vmatpush2.msra.mxu0 0.0
    %623 = vmatprep.subr.mxu0 0.0
    %624 = vmatpush2.msra.mxu0 0.0
    %625 = vmatprep.subr.mxu0 0.0
    %626 = vmatpush2.msra.mxu0 0.0
    %627 = vmatprep.subr.mxu0 0.0
    %628 = vmatpush2.msra.mxu0 0.0
    %629 = vmatprep.subr.mxu0 0.0
    %630 = vmatpush2.msra.mxu0 0.0
    %631 = vmatprep.subr.mxu0 0.0
    %632 = vmatpush2.msra.mxu0 0.0
    %633 = vmatprep.subr.mxu0 0.0
    %634 = vmatpush2.msra.mxu0 0.0
    %635 = vmatprep.subr.mxu0 0.0
    %636 = vmatpush2.msra.mxu0 0.0
    %637 = vmatprep.subr.mxu0 0.0
    %638 = vmatpush2.msra.mxu0 0.0
    %639 = vmatprep.subr.mxu0 0.0
    %640 = vmatpush2.msra.mxu0 0.0
    %641 = vmatprep.subr.mxu0 0.0
    %642 = vmatpush2.msra.mxu0 0.0
    %643 = vmatprep.subr.mxu0 0.0
    %644 = vmatpush2.msra.mxu0 0.0
    %645 = vmatprep.mubr.f32.mxu0 0.0
    %646 = vmatmul.mubr.f32.gmra.mxu0 %v578
    %v647 = vpop.f32.mrf.mxu0
    %v648 = vadd.f32 0.0, %v647
    %v649 = vpop.f32.mrf.mxu0
    %650 = vdwg.mxu0
    %v651 = vadd.f32 %v580, %v648
    %v652 = vtanh.pop %v651
    %653 = vst [vmem:[#allocation2] sm:$0xff] %v652
    // Predicated region
    $region22: #{tpu_custom_call.1} parent=1 // pred_check
      %p654 = pneg %p40
    $region23: #{tpu_custom_call.1} parent=1 // pred_check_branch
      %656 = sbr.rel (%p654) target = $region25
    $region24: #{tpu_custom_call.1} parent=1 // pred_region
      %657 = vst [vmem:[#allocation8] sm:$0xff] %v652
    $region25: #{tpu_custom_call.1} parent=1 // pred_fallthru
      _
    // Predicated region
    $region26: #{tpu_custom_call.1} parent=1 // pred_check
      _
    $region27: #{tpu_custom_call.1} parent=1 // pred_check_branch
      %659 = sbr.rel (0) target = $region29
    $region28: #{tpu_custom_call.1} parent=1 // pred_region
      %s661 = ssub.s32 128, 128
      %662 = vsyncadd [#allocation5], %s661
      %s664 = sshll.u32 [#allocation8], 4
      %s665 = int_to_ptr.vmem [resolvable:$true] %s664
      %667 = dma.vmem_to_hbm [thread:$0]  %s665, 128, %s2, [#allocation5]
    $region29: #{tpu_custom_call.1} parent=1 // pred_fallthru
      _
    // Predicated region
    $region30: #{tpu_custom_call.1} parent=1 // pred_check
      _
    $region31: #{tpu_custom_call.1} parent=1 // pred_check_branch
      %669 = sbr.rel (0) target = $region33
    $region32: #{tpu_custom_call.1} parent=1 // pred_region
      %670 = dma.done [#allocation5], 128
    $region33: #{tpu_custom_call.1} parent=1 // pred_fallthru
      _
    %671 = vsyncpa [#allocation4], 1
    %672 = vsyncpa [#allocation7], 1
    %673 = vsyncpa [#allocation5], 1

</llo_original>
